<compile_context>
chip_gen: v7x
topology: tpu7x:2x2x1
jax: 0.10.0
libtpu: 0.0.40
codegen_flags: <defaults>
</compile_context>

<pallas_src>
import jax
import jax.numpy as jnp
from jax import lax
from jax.experimental import pallas as pl

# Small synthetic graph sizes consistent with the module's forward.
NODE_NUM = 16
FEAT = 8
EDGE_NUM = 128
AUG_SIZE = 0.25
PERMUTE = int(EDGE_NUM * AUG_SIZE)      # 32 edges replaced
KEEP = EDGE_NUM - PERMUTE               # 96 edges kept


def edge_pert_kernel(kept_ref, bits_ref, out_ref):
    """Blend kept edges (first KEEP lanes) with fresh random edges (last PERMUTE lanes)."""
    bits = bits_ref[...]                                              # (2, E) uint32

    # Integer-only uniform sampling in [0, NODE_NUM).
    if NODE_NUM & (NODE_NUM - 1) == 0:
        # power-of-two node count: exact uniform via bit masking
        rnd = (bits & jnp.uint32(NODE_NUM - 1)).astype(jnp.int32)
    else:
        # general case: 24-bit fixed-point range reduction, still integer-only
        rnd = (((bits >> jnp.uint32(8)) * jnp.uint32(NODE_NUM))
               >> jnp.uint32(24)).astype(jnp.int32)

    lane = lax.broadcasted_iota(jnp.int32, (2, EDGE_NUM), 1)          # (2, E)
    # Single full-width (128-lane) unmasked store.
    out_ref[...] = jnp.where(lane >= KEEP, rnd, kept_ref[...])


def edge_pert(x, edge_index, y, key):
    """Pallas-backed EdgePert forward: returns (x, new_edge_index, y)."""
    perm_key, bits_key = jax.random.split(key)

    # TODO(synk): sampling WITHOUT replacement (np.random.choice(..., replace=False))
    # has no clean Pallas equivalent; the edge-subset permutation and the kept-edge
    # gather are computed with plain XLA in the wrapper and fed to the kernel.
    keep_idx = jax.random.permutation(perm_key, EDGE_NUM)[:KEEP].astype(jnp.int32)
    # Pad the gather to a full 128-lane slab; the padded lanes are overwritten
    # by random edges inside the kernel, so any valid index works as filler.
    keep_idx_padded = jnp.concatenate([keep_idx, jnp.zeros((PERMUTE,), jnp.int32)])
    kept = jnp.take(edge_index, keep_idx_padded, axis=1).astype(jnp.int32)   # (2, E)

    # Raw random bits; range reduction to [0, NODE_NUM) happens inside the kernel.
    bits = jax.random.bits(bits_key, (2, EDGE_NUM), dtype=jnp.uint32)

    # TODO(synk): when augmenting many graphs per step, batch B graphs into one
    # call with grid=(B,) and dimension_semantics=("parallel",) to amortize the
    # launch cost and use both v7x TensorCores; forward() handles one graph.
    new_edge_index = pl.pallas_call(
        edge_pert_kernel,
        out_shape=jax.ShapeDtypeStruct((2, EDGE_NUM), jnp.int32),
        in_specs=[
            pl.BlockSpec((2, EDGE_NUM), lambda: (0, 0)),
            pl.BlockSpec((2, EDGE_NUM), lambda: (0, 0)),
        ],
        out_specs=pl.BlockSpec((2, EDGE_NUM), lambda: (0, 0)),
        cost_estimate=pl.CostEstimate(
            flops=4 * EDGE_NUM,
            transcendentals=0,
            bytes_accessed=3 * 2 * EDGE_NUM * 4),
    )(kept, bits)

    # x and y pass through untouched, exactly like Data(x=..., edge_index=..., y=...)
    return x, new_edge_index, y


if __name__ == "__main__":
    key = jax.random.PRNGKey(0)
    kx, ke, kcall = jax.random.split(key, 3)

    x = jax.random.normal(kx, (NODE_NUM, FEAT), dtype=jnp.float32)
    edge_index = jax.random.randint(ke, (2, EDGE_NUM), 0, NODE_NUM, dtype=jnp.int32)
    y = jnp.array([1], dtype=jnp.int32)

    out_x, out_ei, out_y = edge_pert(x, edge_index, y, kcall)
    jax.block_until_ready(out_ei)

    # sanity checks on the perturbed edge index
    assert out_ei.shape == (2, EDGE_NUM) and out_ei.dtype == jnp.int32
    assert bool(jnp.all(out_ei >= 0)) and bool(jnp.all(out_ei < NODE_NUM))
    assert out_x.shape == (NODE_NUM, FEAT) and out_y.shape == (1,)

    # reference check: replicate the wrapper's randomness and verify the blend
    perm_key, bits_key = jax.random.split(kcall)
    ref_keep = jax.random.permutation(perm_key, EDGE_NUM)[:KEEP].astype(jnp.int32)
    assert bool(jnp.all(out_ei[:, :KEEP] == edge_index[:, ref_keep]))
    ref_bits = jax.random.bits(bits_key, (2, EDGE_NUM), dtype=jnp.uint32)
    ref_rnd = (ref_bits[:, KEEP:] & jnp.uint32(NODE_NUM - 1)).astype(jnp.int32)
    assert bool(jnp.all(out_ei[:, KEEP:] == ref_rnd))

    print("KERNEL_OK")
</pallas_src>

<mosaic_0001>
module attributes {stable_mosaic.version = 11 : i64} {
  func.func @edge_pert_kernel(%arg0: memref<2x128xi32, #tpu.memory_space<vmem>>, %arg1: memref<2x128xi32, #tpu.memory_space<vmem>>, %arg2: memref<2x128xi32, #tpu.memory_space<vmem>>) attributes {dimension_semantics = [], scalar_prefetch = 0 : i64, scratch_operands = 0 : i64, tpu.core_type = #tpu.core_type<tc>} {
    %c0 = arith.constant 0 : index
    %c0_0 = arith.constant 0 : index
    %0 = vector.load %arg1[%c0, %c0_0] : memref<2x128xi32, #tpu.memory_space<vmem>>, vector<2x128xi32>
    %c15_i32 = arith.constant 15 : i32
    %1 = vector.broadcast %c15_i32 : i32 to vector<2x128xi32>
    %2 = arith.andi %0, %1 : vector<2x128xi32>
    %3 = tpu.iota {dimensions = array<i32: 1>} : vector<2x128xi32>
    %c96_i32 = arith.constant 96 : i32
    %4 = vector.broadcast %c96_i32 : i32 to vector<2x128xi32>
    %5 = arith.cmpi sge, %3, %4 : vector<2x128xi32>
    %c0_1 = arith.constant 0 : index
    %c0_2 = arith.constant 0 : index
    %6 = vector.load %arg0[%c0_1, %c0_2] : memref<2x128xi32, #tpu.memory_space<vmem>>, vector<2x128xi32>
    %7 = arith.select %5, %2, %6 : vector<2x128xi1>, vector<2x128xi32>
    %c0_3 = arith.constant 0 : index
    %c0_4 = arith.constant 0 : index
    %8 = vector.load %arg2[%c0_3, %c0_4] : memref<2x128xi32, #tpu.memory_space<vmem>>, vector<2x128xi32>
    tpu.vector_store %arg2[%c0_3, %c0_4], %7 {strides = array<i32>} : memref<2x128xi32, #tpu.memory_space<vmem>>, vector<2x128xi32>,
    return
  }
}

</mosaic_0001>

<llo_original>
// kernel: tpu_custom_call.1
$region0: #{tpu_custom_call.1}
  #allocation0 [shape = 'u32[]', space=smem, size = 0x4, offset = 0x4, fixed_abs, tag = 'smem constant byte address 0x4 - core index']
  #allocation1 [shape = 'u32[144,128]{1,0:T(1,128)}', space=vmem, size = 0x12000, scoped, tag = 'internal scratch']
  %s0 = inlined_call_operand.hbm [shape: s32[2,128], index: 0, kind: input, shape index: {}]
  %s1 = inlined_call_operand.vmem [shape: u32[2,128], index: 1, kind: input, shape index: {}]
  %s2 = inlined_call_operand.hbm [shape: s32[2,128], index: 2, kind: output, shape index: {}]
  %s3 = sld [smem:[#allocation0]]
  $region22: #{tpu_custom_call.1} parent=0
    _
  %s5 = ssub.s32 1, %s3
  %s6 = scalar_select 0, %s5, %s3
  $region1: #{tpu_custom_call.1} parent=0
    #allocation2 [shape = 'u8[1024]{0}', space=vmem, size = 0x400, scoped, tag = 'input window, operand 0, single buffered']
    #allocation3 [shape = 's32[1]{0}', space=sflag, size = 0x4, scoped, tag = 'scoped memory for tpu_custom_call.1']
    #allocation4 [shape = 's32[1]{0}', space=sflag, size = 0x4, scoped, tag = 'scoped memory for tpu_custom_call.1']
    #allocation5 [shape = 'u8[1024]{0}', space=vmem, size = 0x400, scoped, tag = 'output window, operand 0, single buffered']
    %7 = vsyncpa [#allocation3], 0
    %8 = vsyncpa [#allocation4], 0
    // Predicated region
    $region2: #{tpu_custom_call.1} parent=1 // pred_check
      _
    $region3: #{tpu_custom_call.1} parent=1 // pred_check_branch
      %10 = sbr.rel (0) target = $region5
    $region4: #{tpu_custom_call.1} parent=1 // pred_region
      %s12 = ssub.s32 32, 32
      %13 = vsyncadd [#allocation3], %s12
      %s15 = sshll.u32 [#allocation2], 4
      %s16 = int_to_ptr.vmem [resolvable:$true] %s15
      %18 = dma.hbm_to_vmem [thread:$0]  %s0, 32, %s16, [#allocation3]
    $region5: #{tpu_custom_call.1} parent=1 // pred_fallthru
      _
    // Predicated region
    $region6: #{tpu_custom_call.1} parent=1 // pred_check
      _
    $region7: #{tpu_custom_call.1} parent=1 // pred_check_branch
      %20 = sbr.rel (0) target = $region9
    $region8: #{tpu_custom_call.1} parent=1 // pred_region
      _
    $region9: #{tpu_custom_call.1} parent=1 // pred_fallthru
      _
    // Predicated region
    $region10: #{tpu_custom_call.1} parent=1 // pred_check
      _
    $region11: #{tpu_custom_call.1} parent=1 // pred_check_branch
      %22 = sbr.rel (0) target = $region13
    $region12: #{tpu_custom_call.1} parent=1 // pred_region
      %23 = dma.done [#allocation3], 32
    $region13: #{tpu_custom_call.1} parent=1 // pred_fallthru
      _
    %v24 = vld [vmem:[%s1] sm:$0x3]
    %v25 = vand.u32 %v24, 15
    %v26 = vlaneseq
    %v27 = vand.u32 %v26, 127
    %vm28 = vcmp.ge.s32.totalorder %v27, 96
    %v29 = vld [vmem:[#allocation2] sm:$0x3]
    %v30 = vsel %vm28, %v25, %v29
    %31 = vst [vmem:[#allocation5] sm:$0x3] %v30
    // Predicated region
    $region14: #{tpu_custom_call.1} parent=1 // pred_check
      _
    $region15: #{tpu_custom_call.1} parent=1 // pred_check_branch
      %33 = sbr.rel (0) target = $region17
    $region16: #{tpu_custom_call.1} parent=1 // pred_region
      %s35 = ssub.s32 32, 32
      %36 = vsyncadd [#allocation4], %s35
      %s38 = sshll.u32 [#allocation5], 4
      %s39 = int_to_ptr.vmem [resolvable:$true] %s38
      %41 = dma.vmem_to_hbm [thread:$0]  %s39, 32, %s2, [#allocation4]
    $region17: #{tpu_custom_call.1} parent=1 // pred_fallthru
      _
    // Predicated region
    $region18: #{tpu_custom_call.1} parent=1 // pred_check
      _
    $region19: #{tpu_custom_call.1} parent=1 // pred_check_branch
      %43 = sbr.rel (0) target = $region21
    $region20: #{tpu_custom_call.1} parent=1 // pred_region
      %44 = dma.done [#allocation4], 32
    $region21: #{tpu_custom_call.1} parent=1 // pred_fallthru
      _
    %45 = vsyncpa [#allocation3], 1
    %46 = vsyncpa [#allocation4], 1

</llo_original>
